<compile_context>
chip_gen: v7x
topology: tpu7x:2x2x1
jax: 0.10.0
libtpu: 0.0.40
codegen_flags: <defaults>
</compile_context>

<pallas_src>
import jax
import jax.numpy as jnp
from jax.experimental import pallas as pl
from jax.experimental.pallas import tpu as pltpu

_LANE = 128
_VMEM_TILE_BUDGET = 32 * 1024 * 1024   # tile-selection budget (safe inside v7x's 64 MiB)
_VMEM_LIMIT_BYTES = 48 * 1024 * 1024   # scoped VMEM limit handed to Mosaic


def _round_up(x, m):
    return ((x + m - 1) // m) * m


def _pick_tile(total, cap, lane=_LANE):
    """Largest multiple of `lane` that divides `total` and is <= cap (>= lane)."""
    cap = max(lane, min(cap, total))
    best = lane
    for c in range(lane, cap + 1, lane):
        if total % c == 0:
            best = c
    return best


def _linear_kernel(x_ref, w_ref, b_ref, o_ref, acc_ref):
    """One (tm, tn) output tile of out = x @ W + b, W already in (K, N) layout.

    x_ref  : (tm, tk)  activations (compute dtype)
    w_ref  : (tk, tn)  weight, pre-transposed (compute dtype)
    b_ref  : (1,  tn)  bias (float32)
    o_ref  : (tm, tn)  output tile (output dtype)
    acc_ref: (tm, tn)  float32 VMEM accumulator, resident across the k axis
    """
    k = pl.program_id(2)

    partial = jnp.dot(x_ref[...], w_ref[...], preferred_element_type=jnp.float32)

    @pl.when(k == 0)
    def _():
        acc_ref[...] = partial            # direct write: no zero-fill store + vadd

    @pl.when(k > 0)
    def _():
        acc_ref[...] += partial

    # Bias add + output cast exactly once, in the last-k epilogue.
    @pl.when(k == pl.num_programs(2) - 1)
    def _():
        o_ref[...] = (acc_ref[...] + b_ref[...]).astype(o_ref.dtype)


def block_model_forward(x, weight, bias, *,
                        compute_dtype=jnp.bfloat16,
                        tm_max=512, tn_max=512, tk_max=1024):
    """Pallas implementation of block_model.forward.

    x      : (B, C, input_len)
    weight : (out_len, input_len)   -- torch nn.Linear layout
    bias   : (out_len,)
    returns: (B, C, out_len) in x.dtype
    """
    B, C, L = x.shape
    N, L_w = weight.shape
    assert L_w == L, "weight shape mismatch"
    M = B * C
    out_dtype = x.dtype

    itemsize = jnp.dtype(compute_dtype).itemsize
    out_itemsize = jnp.dtype(out_dtype).itemsize
    granule_m = 16 if itemsize == 2 else 8          # bf16 packs 2 rows per sublane

    # ---- N: pad to a lane multiple so output stores are full (unmasked) vst ----
    N_pad = _round_up(N, _LANE)
    tn = N_pad if N_pad <= tn_max else _pick_tile(N_pad, tn_max)

    # ---- M tiling: avoid padding x whenever possible ---------------------------
    if M > tm_max:
        tm = tm_max                                  # multiple of granule_m
        M_pad = _round_up(M, tm)                     # only large-M case pays a pad
    elif M % (2 * granule_m) == 0:
        tm = M // 2                                  # >=2 parallel blocks -> both v7x TCs
        M_pad = M
    else:
        tm = M                                       # full-dim block: (8,128)-rule exempt
        M_pad = M

    # ---- K tiling: prefer un-tiled K (weight resident, zero K padding) ---------
    def _footprint(tm_, tk_, tn_):
        return (2 * tm_ * tk_ * itemsize             # x, double-buffered
                + 2 * tk_ * tn_ * itemsize           # W, double-buffered
                + 2 * tm_ * tn_ * out_itemsize       # out, double-buffered
                + tm_ * tn_ * 4)                     # f32 accumulator

    if _footprint(tm, L, tn) <= _VMEM_TILE_BUDGET:
        tk, K_pad = L, L                             # full-dim K block, no pad
    else:
        K_pad = _round_up(L, _LANE)                  # pad K only to the next 128
        tk = _pick_tile(K_pad, tk_max)
        while _footprint(tm, tk, tn) > _VMEM_TILE_BUDGET and tn > _LANE:
            tn = _pick_tile(N_pad, tn // 2)          # shrink N tile before K tile
        while _footprint(tm, tk, tn) > _VMEM_TILE_BUDGET and tk > _LANE:
            tk = _pick_tile(K_pad, tk // 2)

    # ---- operand prep (zero padding is neutral for the matmul) -----------------
    x2 = x.reshape(M, L).astype(compute_dtype)
    if (M_pad, K_pad) != (M, L):
        x2 = jnp.pad(x2, ((0, M_pad - M), (0, K_pad - L)))

    # One-time relayout of the (small, static) weight to (K, N).
    w = weight.T.astype(compute_dtype)
    if (K_pad, N_pad) != (L, N):
        w = jnp.pad(w, ((0, K_pad - L), (0, N_pad - N)))

    b2 = bias.astype(jnp.float32).reshape(1, N)
    if N_pad != N:
        b2 = jnp.pad(b2, ((0, 0), (0, N_pad - N)))

    grid = (M_pad // tm, N_pad // tn, K_pad // tk)

    cost = pl.CostEstimate(
        flops=2 * M_pad * N_pad * K_pad,
        transcendentals=0,
        bytes_accessed=(M_pad * K_pad * itemsize + K_pad * N_pad * itemsize
                        + N_pad * 4 + M_pad * N_pad * out_itemsize),
    )

    out = pl.pallas_call(
        _linear_kernel,
        out_shape=jax.ShapeDtypeStruct((M_pad, N_pad), out_dtype),
        grid_spec=pltpu.PrefetchScalarGridSpec(
            num_scalar_prefetch=0,
            grid=grid,
            in_specs=[
                pl.BlockSpec((tm, tk), lambda i, j, k: (i, k)),   # x
                pl.BlockSpec((tk, tn), lambda i, j, k: (k, j)),   # W (K, N)
                pl.BlockSpec((1, tn), lambda i, j, k: (0, j)),    # bias (f32)
            ],
            out_specs=pl.BlockSpec((tm, tn), lambda i, j, k: (i, j)),
            scratch_shapes=[pltpu.VMEM((tm, tn), jnp.float32)],
        ),
        compiler_params=pltpu.CompilerParams(
            dimension_semantics=("parallel", "parallel", "arbitrary"),
            vmem_limit_bytes=_VMEM_LIMIT_BYTES,
        ),
        cost_estimate=cost,
    )(x2, w, b2)

    return out[:M, :N].reshape(B, C, N)


if __name__ == "__main__":
    # Small shapes consistent with the module: block_model(input_channels=4,
    # input_len=16, out_len=32), batch=2.
    B, C, input_len, out_len = 2, 4, 16, 32

    key = jax.random.PRNGKey(0)
    kx, kw, kb = jax.random.split(key, 3)

    x = jax.random.normal(kx, (B, C, input_len), dtype=jnp.float32)

    # Deterministic parameter init (PyTorch nn.Linear-style uniform bound).
    bound = 1.0 / (input_len ** 0.5)
    weight = jax.random.uniform(kw, (out_len, input_len), jnp.float32,
                                minval=-bound, maxval=bound)
    bias = jax.random.uniform(kb, (out_len,), jnp.float32,
                              minval=-bound, maxval=bound)

    ref = jnp.einsum("bcl,ol->bco", x, weight) + bias

    # Exact-parity path: f32 operands, tight tolerance.
    out_f32 = jax.block_until_ready(
        block_model_forward(x, weight, bias, compute_dtype=jnp.float32))
    assert out_f32.shape == (B, C, out_len)
    assert jnp.allclose(out_f32, ref, atol=1e-5, rtol=1e-5)

    # Default fast path: bf16 operands, f32 accumulation (looser tolerance, expected).
    out_bf16 = jax.block_until_ready(block_model_forward(x, weight, bias))
    assert out_bf16.shape == (B, C, out_len)
    assert jnp.allclose(out_bf16, ref, atol=2e-2, rtol=2e-2)

    print("KERNEL_OK")
</pallas_src>

<mosaic_0001>
module attributes {stable_mosaic.version = 11 : i64} {
  func.func @_linear_kernel(%arg0: i32, %arg1: i32, %arg2: i32, %arg3: memref<8x16xf32, #tpu.memory_space<vmem>>, %arg4: memref<16x128xf32, #tpu.memory_space<vmem>>, %arg5: memref<1x128xf32, #tpu.memory_space<vmem>>, %arg6: memref<8x128xf32, #tpu.memory_space<vmem>>, %arg7: memref<8x128xf32, #tpu.memory_space<vmem>>) attributes {dimension_semantics = [#tpu.dimension_semantics<parallel>, #tpu.dimension_semantics<parallel>, #tpu.dimension_semantics<arbitrary>], iteration_bounds = array<i64: 1, 1, 1>, scalar_prefetch = 0 : i64, scratch_operands = 1 : i64, tpu.core_type = #tpu.core_type<tc>, window_params = [{transform_indices = @transform_0, window_bounds = array<i64: 8, 16>}, {transform_indices = @transform_1, window_bounds = array<i64: 16, 128>}, {transform_indices = @transform_2, window_bounds = array<i64: 1, 128>}, {transform_indices = @transform_3, window_bounds = array<i64: 8, 128>}]} {
    %c0 = arith.constant 0 : index
    %c0_0 = arith.constant 0 : index
    %0 = vector.load %arg3[%c0, %c0_0] : memref<8x16xf32, #tpu.memory_space<vmem>>, vector<8x16xf32>
    %c0_1 = arith.constant 0 : index
    %c0_2 = arith.constant 0 : index
    %1 = vector.load %arg4[%c0_1, %c0_2] : memref<16x128xf32, #tpu.memory_space<vmem>>, vector<16x128xf32>
    %cst = arith.constant dense<0.000000e+00> : vector<8x128xf32>
    %2 = tpu.matmul %0, %1, %cst {dimension_numbers = #tpu.dot_dimension_numbers<[1], [0], [0], [1], [0, 0, 1, 1], [], []>} : vector<8x16xf32>, vector<16x128xf32>, vector<8x128xf32> -> vector<8x128xf32>
    %c0_i32 = arith.constant 0 : i32
    %3 = arith.cmpi eq, %arg2, %c0_i32 : i32
    %4 = arith.extui %3 : i1 to i32
    %c0_i32_3 = arith.constant 0 : i32
    %5 = arith.cmpi ne, %4, %c0_i32_3 : i32
    scf.if %5 {
      %c0_8 = arith.constant 0 : index
      %c0_9 = arith.constant 0 : index
      %12 = vector.load %arg7[%c0_8, %c0_9] : memref<8x128xf32, #tpu.memory_space<vmem>>, vector<8x128xf32>
      tpu.vector_store %arg7[%c0_8, %c0_9], %2 {strides = array<i32>} : memref<8x128xf32, #tpu.memory_space<vmem>>, vector<8x128xf32>,
    } else {
    }
    %c0_i32_4 = arith.constant 0 : i32
    %6 = arith.cmpi sgt, %arg2, %c0_i32_4 : i32
    %7 = arith.extui %6 : i1 to i32
    %c0_i32_5 = arith.constant 0 : i32
    %8 = arith.cmpi ne, %7, %c0_i32_5 : i32
    scf.if %8 {
      %c0_8 = arith.constant 0 : index
      %c0_9 = arith.constant 0 : index
      %12 = vector.load %arg7[%c0_8, %c0_9] : memref<8x128xf32, #tpu.memory_space<vmem>>, vector<8x128xf32>
      %13 = arith.addf %12, %2 : vector<8x128xf32>
      %c0_10 = arith.constant 0 : index
      %c0_11 = arith.constant 0 : index
      %14 = vector.load %arg7[%c0_10, %c0_11] : memref<8x128xf32, #tpu.memory_space<vmem>>, vector<8x128xf32>
      tpu.vector_store %arg7[%c0_10, %c0_11], %13 {strides = array<i32>} : memref<8x128xf32, #tpu.memory_space<vmem>>, vector<8x128xf32>,
    } else {
    }
    %c0_i32_6 = arith.constant 0 : i32
    %9 = arith.cmpi eq, %arg2, %c0_i32_6 : i32
    %10 = arith.extui %9 : i1 to i32
    %c0_i32_7 = arith.constant 0 : i32
    %11 = arith.cmpi ne, %10, %c0_i32_7 : i32
    scf.if %11 {
      %c0_8 = arith.constant 0 : index
      %c0_9 = arith.constant 0 : index
      %12 = vector.load %arg7[%c0_8, %c0_9] : memref<8x128xf32, #tpu.memory_space<vmem>>, vector<8x128xf32>
      %c0_10 = arith.constant 0 : index
      %c0_11 = arith.constant 0 : index
      %13 = vector.load %arg5[%c0_10, %c0_11] : memref<1x128xf32, #tpu.memory_space<vmem>>, vector<1x128xf32>
      %14 = vector.broadcast %13 : vector<1x128xf32> to vector<8x128xf32>
      %15 = arith.addf %12, %14 : vector<8x128xf32>
      %c0_12 = arith.constant 0 : index
      %c0_13 = arith.constant 0 : index
      %16 = vector.load %arg6[%c0_12, %c0_13] : memref<8x128xf32, #tpu.memory_space<vmem>>, vector<8x128xf32>
      tpu.vector_store %arg6[%c0_12, %c0_13], %15 {strides = array<i32>} : memref<8x128xf32, #tpu.memory_space<vmem>>, vector<8x128xf32>,
    } else {
    }
    return
  }
  func.func @transform_0(%arg0: i32, %arg1: i32, %arg2: i32) -> (i32, i32) {
    %c0_i32 = arith.constant 0 : i32
    return %arg0, %arg2 : i32, i32
  }
  func.func @transform_1(%arg0: i32, %arg1: i32, %arg2: i32) -> (i32, i32) {
    %c0_i32 = arith.constant 0 : i32
    return %arg2, %arg1 : i32, i32
  }
  func.func @transform_2(%arg0: i32, %arg1: i32, %arg2: i32) -> (i32, i32) {
    %c0_i32 = arith.constant 0 : i32
    %c0_i32_0 = arith.constant 0 : i32
    return %c0_i32, %arg1 : i32, i32
  }
  func.func @transform_3(%arg0: i32, %arg1: i32, %arg2: i32) -> (i32, i32) {
    %c0_i32 = arith.constant 0 : i32
    return %arg0, %arg1 : i32, i32
  }
}

</mosaic_0001>

<llo_original>
// kernel: tpu_custom_call.1
$region0: #{tpu_custom_call.1}
  #allocation0 [shape = 'u32[]', space=smem, size = 0x4, offset = 0x4, fixed_abs, tag = 'smem constant byte address 0x4 - core index']
  #allocation1 [shape = 'u32[144,128]{1,0:T(1,128)}', space=vmem, size = 0x12000, scoped, tag = 'internal scratch']
  #allocation2 [shape = 'f32[8,128]{1,0:T(8,128)}', space=vmem, size = 0x1000, scoped, tag = 'scratch operand']
  %s0 = inlined_call_operand.hbm [shape: f32[8,16], index: 0, kind: input, shape index: {}]
  %s1 = inlined_call_operand.hbm [shape: f32[16,128], index: 1, kind: input, shape index: {}]
  %s2 = inlined_call_operand.vmem [shape: f32[1,128], index: 2, kind: input, shape index: {}]
  %s3 = inlined_call_operand.hbm [shape: f32[8,128], index: 3, kind: output, shape index: {}]
  %s4 = sld [smem:[#allocation0]]
  $region42: #{tpu_custom_call.1} parent=0
    _
  %s6 = ssub.s32 1, %s4
  %s7 = scalar_select 0, %s6, %s4
  $region1: #{tpu_custom_call.1} parent=0
    #allocation3 [shape = 'u8[4096]{0}', space=vmem, size = 0x1000, scoped, tag = 'input window, operand 0, single buffered']
    #allocation4 [shape = 's32[1]{0}', space=sflag, size = 0x4, scoped, tag = 'scoped memory for tpu_custom_call.1']
    #allocation5 [shape = 's32[1]{0}', space=sflag, size = 0x4, scoped, tag = 'scoped memory for tpu_custom_call.1']
    #allocation6 [shape = 'u8[8192]{0}', space=vmem, size = 0x2000, scoped, tag = 'input window, operand 1, single buffered']
    #allocation7 [shape = 's32[1]{0}', space=sflag, size = 0x4, scoped, tag = 'scoped memory for tpu_custom_call.1']
    #allocation8 [shape = 'u8[4096]{0}', space=vmem, size = 0x1000, scoped, tag = 'output window, operand 0, single buffered']
    %8 = vsyncpa [#allocation4], 0
    %9 = vsyncpa [#allocation7], 0
    %10 = vsyncpa [#allocation5], 0
    // Predicated region
    $region2: #{tpu_custom_call.1} parent=1 // pred_check
      _
    $region3: #{tpu_custom_call.1} parent=1 // pred_check_branch
      %12 = sbr.rel (0) target = $region5
    $region4: #{tpu_custom_call.1} parent=1 // pred_region
      %s14 = ssub.s32 128, 128
      %15 = vsyncadd [#allocation4], %s14
      %s17 = sshll.u32 [#allocation3], 4
      %s18 = int_to_ptr.vmem [resolvable:$true] %s17
      %20 = dma.hbm_to_vmem [thread:$0]  %s0, 128, %s18, [#allocation4]
    $region5: #{tpu_custom_call.1} parent=1 // pred_fallthru
      _
    // Predicated region
    $region6: #{tpu_custom_call.1} parent=1 // pred_check
      _
    $region7: #{tpu_custom_call.1} parent=1 // pred_check_branch
      %22 = sbr.rel (0) target = $region9
    $region8: #{tpu_custom_call.1} parent=1 // pred_region
      %s24 = ssub.s32 256, 256
      %25 = vsyncadd [#allocation7], %s24
      %s26 = sshll.u32 [#allocation6], 4
      %s27 = int_to_ptr.vmem [resolvable:$true] %s26
      %32 = dma.hbm_to_vmem [thread:$0]  %s1, 256, %s27, [#allocation7], 128, 128, 8
    $region9: #{tpu_custom_call.1} parent=1 // pred_fallthru
      _
    // Predicated region
    $region10: #{tpu_custom_call.1} parent=1 // pred_check
      _
    $region11: #{tpu_custom_call.1} parent=1 // pred_check_branch
      %34 = sbr.rel (0) target = $region13
    $region12: #{tpu_custom_call.1} parent=1 // pred_region
      _
    $region13: #{tpu_custom_call.1} parent=1 // pred_fallthru
      _
    // Predicated region
    $region14: #{tpu_custom_call.1} parent=1 // pred_check
      _
    $region15: #{tpu_custom_call.1} parent=1 // pred_check_branch
      %36 = sbr.rel (0) target = $region17
    $region16: #{tpu_custom_call.1} parent=1 // pred_region
      %37 = dma.done [#allocation4], 128
    $region17: #{tpu_custom_call.1} parent=1 // pred_fallthru
      _
    // Predicated region
    $region18: #{tpu_custom_call.1} parent=1 // pred_check
      _
    $region19: #{tpu_custom_call.1} parent=1 // pred_check_branch
      %39 = sbr.rel (0) target = $region21
    $region20: #{tpu_custom_call.1} parent=1 // pred_region
      %40 = dma.done [#allocation7], 256
    $region21: #{tpu_custom_call.1} parent=1 // pred_fallthru
      _
    %v41 = vld [vmem:[#allocation3] sm:$0xff]
    %v42 = vld [vmem:[#allocation6] sm:$0xff]
    %v43 = vld [vmem:[#allocation6 + $0x8] sm:$0xff]
    %vm44 = vcmask 130048
    %v46 = vsel %vm44, %v41, 0
    %48 = vmatprep.subr.mxu0 0.0
    %49 = vmatpush1.msra.mxu0 %v42
    %50 = vmatprep.subr.mxu0 0.0
    %51 = vmatpush1.msra.mxu0 %v43
    %52 = vmatprep.subr.mxu0 0.0
    %53 = vmatpush1.msra.mxu0 0.0
    %54 = vmatprep.subr.mxu0 0.0
    %55 = vmatpush1.msra.mxu0 0.0
    %56 = vmatprep.subr.mxu0 0.0
    %57 = vmatpush1.msra.mxu0 0.0
    %58 = vmatprep.subr.mxu0 0.0
    %59 = vmatpush1.msra.mxu0 0.0
    %60 = vmatprep.subr.mxu0 0.0
    %61 = vmatpush1.msra.mxu0 0.0
    %62 = vmatprep.subr.mxu0 0.0
    %63 = vmatpush1.msra.mxu0 0.0
    %64 = vmatprep.subr.mxu0 0.0
    %65 = vmatpush1.msra.mxu0 0.0
    %66 = vmatprep.subr.mxu0 0.0
    %67 = vmatpush1.msra.mxu0 0.0
    %68 = vmatprep.subr.mxu0 0.0
    %69 = vmatpush1.msra.mxu0 0.0
    %70 = vmatprep.subr.mxu0 0.0
    %71 = vmatpush1.msra.mxu0 0.0
    %72 = vmatprep.subr.mxu0 0.0
    %73 = vmatpush1.msra.mxu0 0.0
    %74 = vmatprep.subr.mxu0 0.0
    %75 = vmatpush1.msra.mxu0 0.0
    %76 = vmatprep.subr.mxu0 0.0
    %77 = vmatpush1.msra.mxu0 0.0
    %78 = vmatprep.subr.mxu0 0.0
    %79 = vmatpush1.msra.mxu0 0.0
    %80 = vmatprep.subr.mxu0 0.0
    %81 = vmatpush1.msra.mxu0 0.0
    %82 = vmatprep.subr.mxu0 0.0
    %83 = vmatpush1.msra.mxu0 0.0
    %84 = vmatprep.subr.mxu0 0.0
    %85 = vmatpush1.msra.mxu0 0.0
    %86 = vmatprep.subr.mxu0 0.0
    %87 = vmatpush1.msra.mxu0 0.0
    %88 = vmatprep.subr.mxu0 0.0
    %89 = vmatpush1.msra.mxu0 0.0
    %90 = vmatprep.subr.mxu0 0.0
    %91 = vmatpush1.msra.mxu0 0.0
    %92 = vmatprep.subr.mxu0 0.0
    %93 = vmatpush1.msra.mxu0 0.0
    %94 = vmatprep.subr.mxu0 0.0
    %95 = vmatpush1.msra.mxu0 0.0
    %96 = vmatprep.subr.mxu0 0.0
    %97 = vmatpush1.msra.mxu0 0.0
    %98 = vmatprep.subr.mxu0 0.0
    %99 = vmatpush1.msra.mxu0 0.0
    %100 = vmatprep.subr.mxu0 0.0
    %101 = vmatpush1.msra.mxu0 0.0
    %102 = vmatprep.subr.mxu0 0.0
    %103 = vmatpush1.msra.mxu0 0.0
    %104 = vmatprep.subr.mxu0 0.0
    %105 = vmatpush1.msra.mxu0 0.0
    %106 = vmatprep.subr.mxu0 0.0
    %107 = vmatpush1.msra.mxu0 0.0
    %108 = vmatprep.subr.mxu0 0.0
    %109 = vmatpush1.msra.mxu0 0.0
    %110 = vmatprep.subr.mxu0 0.0
    %111 = vmatpush1.msra.mxu0 0.0
    %112 = vmatprep.mubr.f32.mxu0 0.0
    %113 = vmatmul.mubr.f32.gmra.mrb[0].mxu0 %v46
    %v114 = vpop.f32.mrb[0].mxu0
    %v115 = vadd.f32 0.0, %v114
    %v116 = vpop.f32.mrb[0].mxu0
    %117 = vdwg.mxu0
    %p118 = scmp.eq.s32.totalorder 0, 0
    // Predicated region
    $region22: #{tpu_custom_call.1} parent=1 // pred_check
      %p119 = pneg %p118
    $region23: #{tpu_custom_call.1} parent=1 // pred_check_branch
      %121 = sbr.rel (%p119) target = $region25
    $region24: #{tpu_custom_call.1} parent=1 // pred_region
      %122 = vst [vmem:[#allocation2] sm:$0xff] %v115
    $region25: #{tpu_custom_call.1} parent=1 // pred_fallthru
      _
    %p123 = scmp.gt.s32.totalorder 0, 0
    // Predicated region
    $region26: #{tpu_custom_call.1} parent=1 // pred_check
      %p124 = pneg %p123
    $region27: #{tpu_custom_call.1} parent=1 // pred_check_branch
      %126 = sbr.rel (%p124) target = $region29
    $region28: #{tpu_custom_call.1} parent=1 // pred_region
      %v127 = vld [vmem:[#allocation2] sm:$0xff]
      %v128 = vadd.f32 %v127, %v115
      %129 = vst [vmem:[#allocation2] sm:$0xff] %v128
    $region29: #{tpu_custom_call.1} parent=1 // pred_fallthru
      _
    // Predicated region
    $region30: #{tpu_custom_call.1} parent=1 // pred_check
      %p130 = pneg %p118
    $region31: #{tpu_custom_call.1} parent=1 // pred_check_branch
      %132 = sbr.rel (%p130) target = $region33
    $region32: #{tpu_custom_call.1} parent=1 // pred_region
      %v133 = vld [vmem:[#allocation2] sm:$0xff]
      %v134 = vld [vmem:[%s2] sm:$0x1]
      %v136 = vlaneseq
      %v137 = vshrl.u32 %v136, 7
      %v138 = vsub.s32 0, %v137
      %v139 = vrot.slane %v134, %v138
      %v141 = vadd.f32 %v133, %v139
      %142 = vst [vmem:[#allocation8] sm:$0xff] %v141
    $region33: #{tpu_custom_call.1} parent=1 // pred_fallthru
      _
    // Predicated region
    $region34: #{tpu_custom_call.1} parent=1 // pred_check
      _
    $region35: #{tpu_custom_call.1} parent=1 // pred_check_branch
      %144 = sbr.rel (0) target = $region37
    $region36: #{tpu_custom_call.1} parent=1 // pred_region
      %s146 = ssub.s32 128, 128
      %147 = vsyncadd [#allocation5], %s146
      %s149 = sshll.u32 [#allocation8], 4
      %s150 = int_to_ptr.vmem [resolvable:$true] %s149
      %152 = dma.vmem_to_hbm [thread:$0]  %s150, 128, %s3, [#allocation5]
    $region37: #{tpu_custom_call.1} parent=1 // pred_fallthru
      _
    // Predicated region
    $region38: #{tpu_custom_call.1} parent=1 // pred_check
      _
    $region39: #{tpu_custom_call.1} parent=1 // pred_check_branch
      %154 = sbr.rel (0) target = $region41
    $region40: #{tpu_custom_call.1} parent=1 // pred_region
      %155 = dma.done [#allocation5], 128
    $region41: #{tpu_custom_call.1} parent=1 // pred_fallthru
      _
    %156 = vsyncpa [#allocation4], 1
    %157 = vsyncpa [#allocation7], 1
    %158 = vsyncpa [#allocation5], 1

</llo_original>
